<compile_context>
chip_gen: v5e
topology: v5e:2x2
jax: 0.10.0
libtpu: 0.0.40
codegen_flags: <defaults>
</compile_context>

<pallas_src>
import functools

import jax
import jax.numpy as jnp
import numpy as np
from jax.experimental import pallas as pl
from jax.experimental.pallas import tpu as pltpu


# ----------------------------------------------------------------------------
# Pallas kernel 1: fused MLP forward (the wrapped module's forward pass)
# ----------------------------------------------------------------------------
def _mlp_fwd_kernel(x_ref, w1_ref, b1_ref, w2_ref, b2_ref, o_ref):
    # bf16 operands feed the MXU; accumulation + bias/ReLU stay in f32.
    x = x_ref[...].astype(jnp.bfloat16)
    w1 = w1_ref[...].astype(jnp.bfloat16)
    h = jnp.dot(x, w1, preferred_element_type=jnp.float32) + b1_ref[...]
    h = jnp.maximum(h, 0.0)  # ReLU
    w2 = w2_ref[...].astype(jnp.bfloat16)
    y = jnp.dot(h.astype(jnp.bfloat16), w2,
                preferred_element_type=jnp.float32) + b2_ref[...]
    o_ref[...] = y.astype(o_ref.dtype)


def mlp_forward(x, w1_t, b1, w2_t, b2, *, tile_b=128):
    """x: [B, Din], w1_t: [Din, H], b1: [1, H], w2_t: [H, Dout], b2: [1, Dout].

    Batch axis is tiled (weights stay resident across batch tiles); the batch
    grid axis is 'parallel' so megacore chips split it.
    """
    B, Din = x.shape
    H = w1_t.shape[1]
    Dout = w2_t.shape[1]
    tb = tile_b if (B % tile_b == 0) else B  # toy shapes fall back to 1 block
    grid = (B // tb,)
    return pl.pallas_call(
        _mlp_fwd_kernel,
        out_shape=jax.ShapeDtypeStruct((B, Dout), jnp.float32),
        grid=grid,
        in_specs=[
            pl.BlockSpec((tb, Din), lambda i: (i, 0)),   # activations: tiled
            pl.BlockSpec((Din, H), lambda i: (0, 0)),    # w1: resident
            pl.BlockSpec((1, H), lambda i: (0, 0)),      # b1: resident
            pl.BlockSpec((H, Dout), lambda i: (0, 0)),   # w2: resident
            pl.BlockSpec((1, Dout), lambda i: (0, 0)),   # b2: resident
        ],
        out_specs=pl.BlockSpec((tb, Dout), lambda i: (i, 0)),
        compiler_params=pltpu.CompilerParams(
            dimension_semantics=("parallel",)),
    )(x, w1_t, b1, w2_t, b2)


# ----------------------------------------------------------------------------
# Pallas kernel 2: bucketed gradient all-reduce-mean
# (dist.all_reduce(SUM) on the flat bucket grad followed by flat_grad.div_(W))
#
# Each replica's flat grad arrives as a separate (R, 128) f32 input; blocks of
# TILE_R rows are streamed through VMEM (double-buffered) and summed in
# registers, then scaled by 1/world_size.  Output aliases replica 0's buffer.
# ----------------------------------------------------------------------------
def _bucket_allreduce_kernel(*refs, inv_world_size):
    *g_refs, o_ref = refs
    acc = g_refs[0][...]
    for g in g_refs[1:]:
        acc = acc + g[...]
    o_ref[...] = acc * inv_world_size


def _pick_tile_rows(total_rows, world_size, budget_bytes=8 << 20):
    # Double-buffered f32: 2 bufs per replica input + 2 bufs for the output.
    per_row_bytes = 2 * (world_size + 1) * 128 * 4
    tr = min(2048, total_rows, max(8, budget_bytes // per_row_bytes))
    return max(8, (tr // 8) * 8)


def bucket_allreduce_mean(replica_flat_2d):
    """replica_flat_2d: list (len world_size) of (R, 128) f32 arrays."""
    world_size = len(replica_flat_2d)
    R, C = replica_flat_2d[0].shape
    tr = _pick_tile_rows(R, world_size)
    grid = (pl.cdiv(R, tr),)
    kern = functools.partial(_bucket_allreduce_kernel,
                             inv_world_size=1.0 / float(world_size))
    cost = pl.CostEstimate(
        flops=world_size * R * C,
        transcendentals=0,
        bytes_accessed=(world_size + 1) * R * C * 4,
    )
    return pl.pallas_call(
        kern,
        out_shape=jax.ShapeDtypeStruct((R, C), jnp.float32),
        grid=grid,
        in_specs=[pl.BlockSpec((tr, C), lambda i: (i, 0))
                  for _ in range(world_size)],
        out_specs=pl.BlockSpec((tr, C), lambda i: (i, 0)),
        compiler_params=pltpu.CompilerParams(
            dimension_semantics=("parallel",),
            vmem_limit_bytes=32 << 20,
        ),
        cost_estimate=cost,
        input_output_aliases={0: 0},  # in-place flat_grad.div_ semantics
    )(*replica_flat_2d)


# ----------------------------------------------------------------------------
# Python-side emulation of DDPBucketed bucket construction (reverse param
# order, greedy packing by byte size) -- mirrors _build_buckets exactly.
# Operates on (name, shape, dtype) metadata only (no array capture).
# ----------------------------------------------------------------------------
def build_buckets(named_param_meta, bucket_size_bytes):
    buckets, cur, cur_size = [], [], 0
    for name, shape, dtype in reversed(named_param_meta):
        p_bytes = int(np.prod(shape)) * jnp.dtype(dtype).itemsize
        if cur and cur_size + p_bytes > bucket_size_bytes:
            buckets.append(cur)
            cur, cur_size = [], 0
        cur.append((name, tuple(shape)))
        cur_size += p_bytes
    if cur:
        buckets.append(cur)
    return buckets


def _round_up(n, m):
    return ((n + m - 1) // m) * m


def make_bucket_reducer(buckets, world_size):
    """Returns a jitted fn: list[world_size] of {name: grad} -> {name: avg_grad}.

    Per bucket: per-replica flatten (_flatten_dense_tensors), pad to a
    multiple of 8*128, reshape to (R, 128), run the tiled Pallas
    all-reduce-mean, slice off padding and unflatten.  Everything runs under
    one jit so bucket kernels pipeline back-to-back with no host syncs.
    """
    def reduce_fn(replica_grads):
        averaged = {}
        for bucket in buckets:
            n = sum(int(np.prod(shape)) for _, shape in bucket)
            n_pad = _round_up(n, 8 * 128)
            flats = []
            for r in range(world_size):
                flat = jnp.concatenate(
                    [replica_grads[r][name].reshape(-1) for name, _ in bucket])
                flat = jnp.pad(flat, (0, n_pad - n))
                flats.append(flat.reshape(n_pad // 128, 128))
            avg_flat = bucket_allreduce_mean(flats).reshape(-1)[:n]
            # _unflatten_dense_tensors equivalent.
            offset = 0
            for name, shape in bucket:
                cnt = int(np.prod(shape))
                averaged[name] = avg_flat[offset:offset + cnt].reshape(shape)
                offset += cnt
        return averaged
    return jax.jit(reduce_fn)


if __name__ == "__main__":
    key = jax.random.PRNGKey(0)
    k1, k2, k3, k4, kx, kg = jax.random.split(key, 6)

    # Small shapes consistent with a generic wrapped module.
    batch, d_in, hidden, d_out = 8, 32, 64, 32
    world_size = 2
    bucket_size_mb = 0.01  # 10485 bytes -> splits the 4 params into 2 buckets

    # Deterministic parameter init (torch Linear layout: weight [out, in]).
    w1 = jax.random.normal(k1, (hidden, d_in), jnp.float32) * 0.02
    b1 = jax.random.normal(k2, (hidden,), jnp.float32) * 0.02
    w2 = jax.random.normal(k3, (d_out, hidden), jnp.float32) * 0.02
    b2 = jax.random.normal(k4, (d_out,), jnp.float32) * 0.02

    x = jax.random.normal(kx, (batch, d_in), jnp.float32)

    # ---------------- forward pass (DDPBucketed.forward -> module.forward) ---
    y = mlp_forward(x, w1.T, b1[None, :], w2.T, b2[None, :])
    y = jax.block_until_ready(y)

    # Reference uses the same bf16-operand / f32-accumulate contraction.
    xb = x.astype(jnp.bfloat16)
    h_ref = jnp.maximum(
        jnp.dot(xb, w1.T.astype(jnp.bfloat16),
                preferred_element_type=jnp.float32) + b1[None, :], 0.0)
    y_ref = jnp.dot(h_ref.astype(jnp.bfloat16), w2.T.astype(jnp.bfloat16),
                    preferred_element_type=jnp.float32) + b2[None, :]
    np.testing.assert_allclose(np.asarray(y), np.asarray(y_ref),
                               rtol=1e-3, atol=1e-3)

    # ---------------- gradient bucketing + all-reduce-mean -------------------
    # Synthetic per-replica gradients (one set per "rank"), deterministic.
    param_meta = [("w1", w1.shape, w1.dtype), ("b1", b1.shape, b1.dtype),
                  ("w2", w2.shape, w2.dtype), ("b2", b2.shape, b2.dtype)]
    param_shapes = {name: shape for name, shape, _ in param_meta}
    grad_keys = jax.random.split(kg, world_size * len(param_meta)).reshape(
        world_size, len(param_meta), 2)
    replica_grads = [
        {name: jax.random.normal(grad_keys[r, i], shape, jnp.float32)
         for i, (name, shape, _) in enumerate(param_meta)}
        for r in range(world_size)
    ]

    bucket_size_bytes = int(bucket_size_mb * 1024 * 1024)
    buckets = build_buckets(param_meta, bucket_size_bytes)

    # Single jitted pass over all buckets; one host sync at the very end.
    reducer = make_bucket_reducer(buckets, world_size)
    averaged_grads = jax.block_until_ready(reducer(replica_grads))

    # Reference: all_reduce(SUM) / world_size, per parameter.
    for name, shape, _ in param_meta:
        ref = sum(replica_grads[r][name] for r in range(world_size)) / world_size
        np.testing.assert_allclose(np.asarray(averaged_grads[name]),
                                   np.asarray(ref), rtol=1e-6, atol=1e-6)
        assert averaged_grads[name].shape == shape

    assert set(averaged_grads.keys()) == {name for name, _, _ in param_meta}
    print("KERNEL_OK")
</pallas_src>

<mosaic_0001>
module attributes {stable_mosaic.version = 11 : i64} {
  func.func @_mlp_fwd_kernel(%arg0: i32, %arg1: memref<8x32xf32, #tpu.memory_space<vmem>>, %arg2: memref<32x64xf32, #tpu.memory_space<vmem>>, %arg3: memref<1x64xf32, #tpu.memory_space<vmem>>, %arg4: memref<64x32xf32, #tpu.memory_space<vmem>>, %arg5: memref<1x32xf32, #tpu.memory_space<vmem>>, %arg6: memref<8x32xf32, #tpu.memory_space<vmem>>) attributes {dimension_semantics = [#tpu.dimension_semantics<parallel>], iteration_bounds = array<i64: 1>, scalar_prefetch = 0 : i64, scratch_operands = 0 : i64, tpu.core_type = #tpu.core_type<tc>, window_params = [{transform_indices = @transform_0, window_bounds = array<i64: 8, 32>}, {pipeline_mode = #tpu.pipeline_mode<synchronous>, transform_indices = @transform_1, window_bounds = array<i64: 32, 64>}, {pipeline_mode = #tpu.pipeline_mode<synchronous>, transform_indices = @transform_2, window_bounds = array<i64: 1, 64>}, {pipeline_mode = #tpu.pipeline_mode<synchronous>, transform_indices = @transform_3, window_bounds = array<i64: 64, 32>}, {pipeline_mode = #tpu.pipeline_mode<synchronous>, transform_indices = @transform_4, window_bounds = array<i64: 1, 32>}, {transform_indices = @transform_5, window_bounds = array<i64: 8, 32>}]} {
    %c0 = arith.constant 0 : index
    %c0_0 = arith.constant 0 : index
    %0 = vector.load %arg1[%c0, %c0_0] : memref<8x32xf32, #tpu.memory_space<vmem>>, vector<8x32xf32>
    %1 = arith.truncf %0 : vector<8x32xf32> to vector<8x32xbf16>
    %c0_1 = arith.constant 0 : index
    %c0_2 = arith.constant 0 : index
    %2 = vector.load %arg2[%c0_1, %c0_2] : memref<32x64xf32, #tpu.memory_space<vmem>>, vector<32x64xf32>
    %3 = arith.truncf %2 : vector<32x64xf32> to vector<32x64xbf16>
    %cst = arith.constant dense<0.000000e+00> : vector<8x64xf32>
    %4 = tpu.matmul %1, %3, %cst {dimension_numbers = #tpu.dot_dimension_numbers<[1], [0], [0], [1], [0, 0, 1, 1], [], []>} : vector<8x32xbf16>, vector<32x64xbf16>, vector<8x64xf32> -> vector<8x64xf32>
    %c0_3 = arith.constant 0 : index
    %c0_4 = arith.constant 0 : index
    %5 = vector.load %arg3[%c0_3, %c0_4] : memref<1x64xf32, #tpu.memory_space<vmem>>, vector<1x64xf32>
    %6 = vector.broadcast %5 : vector<1x64xf32> to vector<8x64xf32>
    %7 = arith.addf %4, %6 : vector<8x64xf32>
    %cst_5 = arith.constant 0.000000e+00 : f32
    %8 = vector.broadcast %cst_5 : f32 to vector<8x64xf32>
    %9 = arith.maximumf %7, %8 : vector<8x64xf32>
    %c0_6 = arith.constant 0 : index
    %c0_7 = arith.constant 0 : index
    %10 = vector.load %arg4[%c0_6, %c0_7] : memref<64x32xf32, #tpu.memory_space<vmem>>, vector<64x32xf32>
    %11 = arith.truncf %10 : vector<64x32xf32> to vector<64x32xbf16>
    %12 = arith.truncf %9 : vector<8x64xf32> to vector<8x64xbf16>
    %cst_8 = arith.constant dense<0.000000e+00> : vector<8x32xf32>
    %13 = tpu.matmul %12, %11, %cst_8 {dimension_numbers = #tpu.dot_dimension_numbers<[1], [0], [0], [1], [0, 0, 1, 1], [], []>} : vector<8x64xbf16>, vector<64x32xbf16>, vector<8x32xf32> -> vector<8x32xf32>
    %c0_9 = arith.constant 0 : index
    %c0_10 = arith.constant 0 : index
    %14 = vector.load %arg5[%c0_9, %c0_10] : memref<1x32xf32, #tpu.memory_space<vmem>>, vector<1x32xf32>
    %15 = vector.broadcast %14 : vector<1x32xf32> to vector<8x32xf32>
    %16 = arith.addf %13, %15 : vector<8x32xf32>
    %c0_11 = arith.constant 0 : index
    %c0_12 = arith.constant 0 : index
    %17 = vector.load %arg6[%c0_11, %c0_12] : memref<8x32xf32, #tpu.memory_space<vmem>>, vector<8x32xf32>
    tpu.vector_store %arg6[%c0_11, %c0_12], %16 {strides = array<i32>} : memref<8x32xf32, #tpu.memory_space<vmem>>, vector<8x32xf32>,
    return
  }
  func.func @transform_0(%arg0: i32) -> (i32, i32) {
    %c0_i32 = arith.constant 0 : i32
    %c0_i32_0 = arith.constant 0 : i32
    return %arg0, %c0_i32 : i32, i32
  }
  func.func @transform_1(%arg0: i32) -> (i32, i32) {
    %c0_i32 = arith.constant 0 : i32
    %c0_i32_0 = arith.constant 0 : i32
    %c0_i32_1 = arith.constant 0 : i32
    return %c0_i32, %c0_i32_0 : i32, i32
  }
  func.func @transform_2(%arg0: i32) -> (i32, i32) {
    %c0_i32 = arith.constant 0 : i32
    %c0_i32_0 = arith.constant 0 : i32
    %c0_i32_1 = arith.constant 0 : i32
    return %c0_i32, %c0_i32_0 : i32, i32
  }
  func.func @transform_3(%arg0: i32) -> (i32, i32) {
    %c0_i32 = arith.constant 0 : i32
    %c0_i32_0 = arith.constant 0 : i32
    %c0_i32_1 = arith.constant 0 : i32
    return %c0_i32, %c0_i32_0 : i32, i32
  }
  func.func @transform_4(%arg0: i32) -> (i32, i32) {
    %c0_i32 = arith.constant 0 : i32
    %c0_i32_0 = arith.constant 0 : i32
    %c0_i32_1 = arith.constant 0 : i32
    return %c0_i32, %c0_i32_0 : i32, i32
  }
  func.func @transform_5(%arg0: i32) -> (i32, i32) {
    %c0_i32 = arith.constant 0 : i32
    %c0_i32_0 = arith.constant 0 : i32
    return %arg0, %c0_i32 : i32, i32
  }
}

</mosaic_0001>

<llo_original>
// kernel: tpu_custom_call.1
$region0: #{tpu_custom_call.1}
  #allocation0 [shape = 'u32[]', space=smem, size = 0x4, offset = 0x4, fixed_abs, tag = 'smem constant byte address 0x4 - core index']
  #allocation1 [shape = 'u32[72,128]{1,0:T(1,128)}', space=vmem, size = 0x9000, scoped, tag = 'internal scratch']
  %s0 = inlined_call_operand.vmem [shape: f32[8,32], index: 0, kind: input, shape index: {}]
  %s1 = inlined_call_operand.vmem [shape: f32[32,64], index: 1, kind: input, shape index: {}]
  %s2 = inlined_call_operand.vmem [shape: f32[1,64], index: 2, kind: input, shape index: {}]
  %s3 = inlined_call_operand.vmem [shape: f32[64,32], index: 3, kind: input, shape index: {}]
  %s4 = inlined_call_operand.vmem [shape: f32[1,32], index: 4, kind: input, shape index: {}]
  %s5 = inlined_call_operand.hbm [shape: f32[8,32], index: 5, kind: output, shape index: {}]
  %s6 = sld [smem:[#allocation0]]
  $region30: #{tpu_custom_call.1} parent=0
    _
  %s8 = ssub.s32 1, %s6
  %s9 = scalar_select 0, %s8, %s6
  $region1: #{tpu_custom_call.1} parent=0
    #allocation2 [shape = 'u8[4096]{0}', space=vmem, size = 0x1000, scoped, tag = 'output window, operand 0, single buffered']
    #allocation3 [shape = 's32[1]{0}', space=sflag, size = 0x4, scoped, tag = 'scoped memory for tpu_custom_call.1']
    %10 = vsyncpa [#allocation3], 0
    // Predicated region
    $region2: #{tpu_custom_call.1} parent=1 // pred_check
      _
    $region3: #{tpu_custom_call.1} parent=1 // pred_check_branch
      %12 = sbr.rel (0) target = $region5
    $region4: #{tpu_custom_call.1} parent=1 // pred_region
      _
    $region5: #{tpu_custom_call.1} parent=1 // pred_fallthru
      _
    // Predicated region
    $region6: #{tpu_custom_call.1} parent=1 // pred_check
      _
    $region7: #{tpu_custom_call.1} parent=1 // pred_check_branch
      %14 = sbr.rel (0) target = $region9
    $region8: #{tpu_custom_call.1} parent=1 // pred_region
      _
    $region9: #{tpu_custom_call.1} parent=1 // pred_fallthru
      _
    // Predicated region
    $region10: #{tpu_custom_call.1} parent=1 // pred_check
      _
    $region11: #{tpu_custom_call.1} parent=1 // pred_check_branch
      %16 = sbr.rel (0) target = $region13
    $region12: #{tpu_custom_call.1} parent=1 // pred_region
      _
    $region13: #{tpu_custom_call.1} parent=1 // pred_fallthru
      _
    // Predicated region
    $region14: #{tpu_custom_call.1} parent=1 // pred_check
      _
    $region15: #{tpu_custom_call.1} parent=1 // pred_check_branch
      %18 = sbr.rel (0) target = $region17
    $region16: #{tpu_custom_call.1} parent=1 // pred_region
      _
    $region17: #{tpu_custom_call.1} parent=1 // pred_fallthru
      _
    // Predicated region
    $region18: #{tpu_custom_call.1} parent=1 // pred_check
      _
    $region19: #{tpu_custom_call.1} parent=1 // pred_check_branch
      %20 = sbr.rel (0) target = $region21
    $region20: #{tpu_custom_call.1} parent=1 // pred_region
      _
    $region21: #{tpu_custom_call.1} parent=1 // pred_fallthru
      _
    %v22 = vld [vmem:[%s0] sm:$0xff]
    %v23 = vpack.c.bf16 %v22, %v22
    %v24 = vld [vmem:[%s1] sm:$0xff]
    %v25 = vld [vmem:[%s1 + $0x8] sm:$0xff]
    %v26 = vld [vmem:[%s1 + $0x10] sm:$0xff]
    %v27 = vld [vmem:[%s1 + $0x18] sm:$0xff]
    %v28 = vpack.c.bf16 %v25, %v24
    %v29 = vpack.c.bf16 %v27, %v26
    %v30 = vld [vmem:[%s2] sm:$0x1]
    %v32 = vperm.slane %v30, 0
    %vm34 = vcmask 261120
    %v36 = vsel %vm34, %v23, 0
    %38 = vmatpush.bf16.msra.mxu0 0
    %39 = vmatpush.bf16.msra.mxu0 0
    %40 = vmatpush.bf16.msra.mxu0 0
    %41 = vmatpush.bf16.msra.mxu0 0
    %42 = vmatpush.bf16.msra.mxu0 0
    %43 = vmatpush.bf16.msra.mxu0 0
    %44 = vmatpush.bf16.msra.mxu0 %v29
    %45 = vmatpush.bf16.msra.mxu0 %v28
    %46 = vmatmul.bf16.gmra.mxu0 %v36
    %v47 = vpop.f32.mrf.mxu0
    %v48 = vadd.f32 %v32, %v47
    %v49 = vpop.f32.mrf.mxu0
    %50 = vdwg.mxu0
    %v51 = vmax.f32 %v48, 0.0
    %v52 = vld [vmem:[%s3] sm:$0xff]
    %v53 = vld [vmem:[%s3 + $0x8] sm:$0xff]
    %v54 = vld [vmem:[%s3 + $0x10] sm:$0xff]
    %v55 = vld [vmem:[%s3 + $0x18] sm:$0xff]
    %v56 = vld [vmem:[%s3 + $0x20] sm:$0xff]
    %v57 = vld [vmem:[%s3 + $0x28] sm:$0xff]
    %v58 = vld [vmem:[%s3 + $0x30] sm:$0xff]
    %v59 = vld [vmem:[%s3 + $0x38] sm:$0xff]
    %v60 = vpack.c.bf16 %v53, %v52
    %v61 = vpack.c.bf16 %v55, %v54
    %v62 = vpack.c.bf16 %v57, %v56
    %v63 = vpack.c.bf16 %v59, %v58
    %v64 = vpack.c.bf16 %v51, %v51
    %v65 = vld [vmem:[%s4] sm:$0x1]
    %v67 = vperm.slane %v65, 0
    %vm69 = vcmask 523264
    %v71 = vsel %vm69, %v64, 0
    %73 = vmatpush.bf16.msra.mxu0 0
    %74 = vmatpush.bf16.msra.mxu0 0
    %75 = vmatpush.bf16.msra.mxu0 0
    %76 = vmatpush.bf16.msra.mxu0 0
    %77 = vmatpush.bf16.msra.mxu0 %v63
    %78 = vmatpush.bf16.msra.mxu0 %v62
    %79 = vmatpush.bf16.msra.mxu0 %v61
    %80 = vmatpush.bf16.msra.mxu0 %v60
    %81 = vmatmul.bf16.gmra.mxu0 %v71
    %v82 = vpop.f32.mrf.mxu0
    %v83 = vadd.f32 %v67, %v82
    %v84 = vpop.f32.mrf.mxu0
    %85 = vdwg.mxu0
    %86 = vst.msk [vmem:[#allocation2] sm:$0xff] %vm34, %v83
    // Predicated region
    $region22: #{tpu_custom_call.1} parent=1 // pred_check
      _
    $region23: #{tpu_custom_call.1} parent=1 // pred_check_branch
      %88 = sbr.rel (0) target = $region25
    $region24: #{tpu_custom_call.1} parent=1 // pred_region
      %90 = vsyncadd [#allocation3], 0
      %s92 = sshll.u32 [#allocation2], 4
      %s93 = int_to_ptr.vmem [resolvable:$true] %s92
      %s94 = sshll.u32 %s5, 4
      %s95 = int_to_ptr.hbm [resolvable:$true] %s94
      %97 = dma.vmem_to_hbm [thread:$0]  %s93, 128, %s95, [#allocation3]
    $region25: #{tpu_custom_call.1} parent=1 // pred_fallthru
      _
    // Predicated region
    $region26: #{tpu_custom_call.1} parent=1 // pred_check
      _
    $region27: #{tpu_custom_call.1} parent=1 // pred_check_branch
      %99 = sbr.rel (0) target = $region29
    $region28: #{tpu_custom_call.1} parent=1 // pred_region
      %101 = dma.done [#allocation3], 128
    $region29: #{tpu_custom_call.1} parent=1 // pred_fallthru
      _
    %102 = vsyncpa [#allocation3], 1

</llo_original>
